<compile_context>
chip_gen: v7x
topology: tpu7x:2x2x1
jax: 0.10.0
libtpu: 0.0.40
codegen_flags: <defaults>
</compile_context>

<pallas_src>
import jax
import jax.numpy as jnp
from jax.experimental import pallas as pl
from jax.experimental.pallas import tpu as pltpu


def _make_wiring_cost_kernel(sub: int):
    """Build the kernel; `sub` is the sublane fold (8 normally, 1 fallback)."""

    def kernel(w_ref, attn_ref, out_ref):
        r = pl.program_id(1)

        @pl.when(r == 0)
        def _():
            out_ref[...] = jnp.zeros_like(out_ref)

        w = w_ref[...].astype(jnp.float32)      # (TR, N) weight row tile
        a = attn_ref[...].astype(jnp.float32)   # (TR, N) attn row tile
        # weight >= 0 by construction, so |w * a| == w * |a|.
        prod = w * jnp.abs(a)
        tr, n = prod.shape
        # Fold rows into a (sub, N) partial with pure VPU vreg adds (the
        # reshape only regroups sublanes, so it is layout-free); the output
        # block is resident across the row-tile axis and acts as accumulator.
        out_ref[0] += jnp.sum(prod.reshape(tr // sub, sub, n), axis=0)

    return kernel


def _pick_row_tile(n: int, bytes_per_row: int, budget_bytes: int = 24 << 20) -> int:
    """Pick a row tile TR that divides N, is a multiple of 8 (or == N), and
    keeps the double-buffered attn + weight tiles within the VMEM budget."""
    if n * bytes_per_row <= budget_bytes:
        return n  # full extent: weight block index is constant -> DMA'd once
    cap = min(n, 1024)
    best = 0
    for tr in range(8, cap + 1, 8):
        if n % tr == 0 and tr * bytes_per_row <= budget_bytes:
            best = tr
    if best:
        return best
    # TODO(synk): N with no suitable multiple-of-8 divisor falls back to full
    # rows (correct, but may need a larger vmem limit for very large N).
    return n


def l1_wiring_cost(weight: jax.Array, attn: jax.Array, lambd: float) -> jax.Array:
    """weight: (N, N); attn: (..., N, N) in its native dtype. Returns scalar loss."""
    n = weight.shape[-1]
    attn_flat = attn.reshape(-1, n, n)      # (BH, N, N)
    bh = attn_flat.shape[0]

    bytes_per_row = 2 * n * attn_flat.dtype.itemsize + 2 * n * weight.dtype.itemsize
    tr = _pick_row_tile(n, bytes_per_row)
    sub = 8 if tr % 8 == 0 else 1
    n_r = n // tr

    weight_reads = 1 if n_r == 1 else bh    # tiled weight is re-read per BH slab
    cost = pl.CostEstimate(
        flops=2 * bh * n * n,
        transcendentals=0,
        bytes_accessed=(attn_flat.size * attn_flat.dtype.itemsize
                        + weight_reads * weight.size * weight.dtype.itemsize
                        + bh * sub * n * 4),
    )

    partials = pl.pallas_call(
        _make_wiring_cost_kernel(sub),
        out_shape=jax.ShapeDtypeStruct((bh, sub, n), jnp.float32),
        grid_spec=pltpu.PrefetchScalarGridSpec(
            num_scalar_prefetch=0,
            grid=(bh, n_r),
            in_specs=[
                # weight row tile, broadcast over BH
                pl.BlockSpec((tr, n), lambda i, r: (r, 0)),
                # attn row tile; leading BH dim squeezed so the kernel sees 2-D
                pl.BlockSpec((pl.Squeezed(), tr, n), lambda i, r: (i, r, 0)),
            ],
            # per-BH partial accumulator, resident across the row-tile axis
            out_specs=pl.BlockSpec((1, sub, n), lambda i, r: (i, 0, 0)),
        ),
        compiler_params=pltpu.CompilerParams(
            dimension_semantics=("parallel", "arbitrary"),
            vmem_limit_bytes=48 << 20,
        ),
        cost_estimate=cost,
    )(weight, attn_flat)

    # .sum(dim=-1) then .mean() over (B, H, N)  ==  total_sum / (BH * N)
    total = jnp.sum(partials)
    loss = lambd * total / (bh * n)
    return loss.astype(jnp.result_type(weight.dtype, attn.dtype))


def make_weight(geometry: jax.Array, p: float) -> jax.Array:
    w = geometry ** p
    w = w / jnp.mean(w)
    return w.astype(jnp.float32)


def reference_loss(weight, attn, lambd):
    return lambd * jnp.mean(jnp.sum(jnp.abs(weight * attn), axis=-1))


if __name__ == "__main__":
    key = jax.random.PRNGKey(0)
    B, H, N = 2, 4, 8
    lambd, p = 0.1, 1.0

    # Deterministic geometry: pairwise 1-D distances between token positions.
    pos = jnp.arange(N, dtype=jnp.float32)
    geometry = jnp.abs(pos[:, None] - pos[None, :])
    weight = make_weight(geometry, p)

    logits = jax.random.normal(key, (B, H, N, N), dtype=jnp.float32)
    attn = jax.nn.softmax(logits, axis=-1)

    # f32 attention path
    loss = l1_wiring_cost(weight, attn, lambd)
    jax.block_until_ready(loss)
    ref = reference_loss(weight, attn, lambd)
    assert jnp.allclose(loss, ref, rtol=1e-5, atol=1e-6), (loss, ref)

    # native bf16 attention path (halved HBM traffic in the kernel)
    attn_bf16 = attn.astype(jnp.bfloat16)
    loss_bf16 = l1_wiring_cost(weight, attn_bf16, lambd)
    jax.block_until_ready(loss_bf16)
    ref_bf16 = reference_loss(weight, attn_bf16, lambd)
    assert jnp.allclose(loss_bf16, ref_bf16, rtol=1e-4, atol=1e-5), (loss_bf16, ref_bf16)

    print("KERNEL_OK")
</pallas_src>

<mosaic_0001>
module attributes {stable_mosaic.version = 11 : i64} {
  func.func @kernel(%arg0: i32, %arg1: i32, %arg2: memref<8x8xf32, #tpu.memory_space<vmem>>, %arg3: memref<1x8x8xf32, #tpu.memory_space<vmem>>, %arg4: memref<1x8x8xf32, #tpu.memory_space<vmem>>) attributes {dimension_semantics = [#tpu.dimension_semantics<parallel>, #tpu.dimension_semantics<arbitrary>], iteration_bounds = array<i64: 8, 1>, scalar_prefetch = 0 : i64, scratch_operands = 0 : i64, tpu.core_type = #tpu.core_type<tc>, window_params = [{transform_indices = @transform_0, window_bounds = array<i64: 8, 8>}, {transform_indices = @transform_1, window_bounds = array<i64: 1, 8, 8>}, {transform_indices = @transform_2, window_bounds = array<i64: 1, 8, 8>}]} {
    %c0_i32 = arith.constant 0 : i32
    %0 = arith.cmpi eq, %arg1, %c0_i32 : i32
    %1 = arith.extui %0 : i1 to i32
    %c0_i32_0 = arith.constant 0 : i32
    %2 = arith.cmpi ne, %1, %c0_i32_0 : i32
    scf.if %2 {
      %cst_11 = arith.constant 0.000000e+00 : f32
      %16 = vector.broadcast %cst_11 : f32 to vector<1x8x8xf32>
      %c0_12 = arith.constant 0 : index
      %c0_13 = arith.constant 0 : index
      %c0_14 = arith.constant 0 : index
      %17 = vector.load %arg4[%c0_12, %c0_13, %c0_14] : memref<1x8x8xf32, #tpu.memory_space<vmem>>, vector<1x8x8xf32>
      tpu.vector_store %arg4[%c0_12, %c0_13, %c0_14], %16 {strides = array<i32>} : memref<1x8x8xf32, #tpu.memory_space<vmem>>, vector<1x8x8xf32>,
    } else {
    }
    %c0 = arith.constant 0 : index
    %c0_1 = arith.constant 0 : index
    %3 = vector.load %arg2[%c0, %c0_1] : memref<8x8xf32, #tpu.memory_space<vmem>>, vector<8x8xf32>
    %c0_2 = arith.constant 0 : index
    %c0_3 = arith.constant 0 : index
    %c0_4 = arith.constant 0 : index
    %4 = vector.load %arg3[%c0_2, %c0_3, %c0_4] : memref<1x8x8xf32, #tpu.memory_space<vmem>>, vector<1x8x8xf32>
    %5 = vector.shape_cast %4 : vector<1x8x8xf32> to vector<8x8xf32>
    %6 = math.absf %5 : vector<8x8xf32>
    %7 = arith.mulf %3, %6 : vector<8x8xf32>
    %c0_5 = arith.constant 0 : index
    %c0_6 = arith.constant 0 : index
    %c0_7 = arith.constant 0 : index
    %8 = vector.load %arg4[%c0_5, %c0_6, %c0_7] : memref<1x8x8xf32, #tpu.memory_space<vmem>>, vector<1x8x8xf32>
    %9 = vector.shape_cast %8 : vector<1x8x8xf32> to vector<8x8xf32>
    %10 = vector.shape_cast %7 : vector<8x8xf32> to vector<1x8x8xf32>
    %cst = arith.constant dense<0.000000e+00> : vector<8x8xf32>
    %11 = vector.multi_reduction <add>, %10, %cst [0] : vector<1x8x8xf32> to vector<8x8xf32>
    %12 = arith.addf %9, %11 : vector<8x8xf32>
    %c0_8 = arith.constant 0 : index
    %c0_9 = arith.constant 0 : index
    %c0_10 = arith.constant 0 : index
    %13 = vector.load %arg4[%c0_8, %c0_9, %c0_10] : memref<1x8x8xf32, #tpu.memory_space<vmem>>, vector<1x8x8xf32>
    %14 = vector.shape_cast %13 : vector<1x8x8xf32> to vector<8x8xf32>
    %15 = vector.shape_cast %12 : vector<8x8xf32> to vector<1x8x8xf32>
    tpu.vector_store %arg4[%c0_8, %c0_9, %c0_10], %15 {strides = array<i32>} : memref<1x8x8xf32, #tpu.memory_space<vmem>>, vector<1x8x8xf32>,
    return
  }
  func.func @transform_0(%arg0: i32, %arg1: i32) -> (i32, i32) {
    %c0_i32 = arith.constant 0 : i32
    %c0_i32_0 = arith.constant 0 : i32
    return %arg1, %c0_i32 : i32, i32
  }
  func.func @transform_1(%arg0: i32, %arg1: i32) -> (i32, i32, i32) {
    %c0_i32 = arith.constant 0 : i32
    %c0_i32_0 = arith.constant 0 : i32
    return %arg0, %arg1, %c0_i32 : i32, i32, i32
  }
  func.func @transform_2(%arg0: i32, %arg1: i32) -> (i32, i32, i32) {
    %c0_i32 = arith.constant 0 : i32
    %c0_i32_0 = arith.constant 0 : i32
    %c0_i32_1 = arith.constant 0 : i32
    return %arg0, %c0_i32, %c0_i32_0 : i32, i32, i32
  }
}

</mosaic_0001>

<llo_original>
// kernel: tpu_custom_call.1
$region0: #{tpu_custom_call.1}
  #allocation0 [shape = 'u32[]', space=smem, size = 0x4, offset = 0x4, fixed_abs, tag = 'smem constant byte address 0x4 - core index']
  #allocation1 [shape = 'u32[144,128]{1,0:T(1,128)}', space=vmem, size = 0x12000, scoped, tag = 'internal scratch']
  %s0 = inlined_call_operand.hbm [shape: f32[8,8], index: 0, kind: input, shape index: {}]
  %s1 = inlined_call_operand.hbm [shape: f32[8,8,8], index: 1, kind: input, shape index: {}]
  %s2 = inlined_call_operand.hbm [shape: f32[8,8,8], index: 2, kind: output, shape index: {}]
  %s3 = sld [smem:[#allocation0]]
  $region53: #{tpu_custom_call.1} parent=0
    _
  %s5 = ssub.s32 1, %s3
  %s6 = scalar_select 0, %s5, %s3
  $region1: #{tpu_custom_call.1} parent=0
    #allocation2 [shape = 'u8[4096]{0}', space=vmem, size = 0x1000, scoped, tag = 'input window, operand 0, single buffered']
    #allocation3 [shape = 's32[2]{0}', space=sflag, size = 0x8, scoped, tag = 'scoped memory for tpu_custom_call.1']
    #allocation4 [shape = 's32[2]{0}', space=sflag, size = 0x8, scoped, tag = 'scoped memory for tpu_custom_call.1']
    #allocation5 [shape = 'u8[8192]{0}', space=vmem, size = 0x2000, scoped, tag = 'input window, operand 1']
    #allocation6 [shape = 's32[2]{0}', space=sflag, size = 0x8, scoped, tag = 'scoped memory for tpu_custom_call.1']
    #allocation7 [shape = 'u8[8192]{0}', space=vmem, size = 0x2000, scoped, tag = 'output window, operand 0']
    %7 = vsyncpa [#allocation3], 0
    %8 = vsyncpa [#allocation6], 0
    %s9 = scalar_lea.sflag [#allocation6], 1
    %10 = vsyncpa %s9, 0
    %11 = vsyncpa [#allocation4], 0
    %s12 = scalar_lea.sflag [#allocation4], 1
    %13 = vsyncpa %s12, 0
    loop: start=0, step=1, limit=10
    $region2: #{tpu_custom_call.1} parent=1 // loop_pre_header
      _
    $region3: #{tpu_custom_call.1} parent=1 // loop_header
      %s15 = sphi 0, %s19
      %p16 = scmp.ge.s32.totalorder %s15, 10
      %s22 = sphi 0, %s34
      %s23 = sphi 0, %s30
      %s24 = sphi 0, %s22
      %s25 = sphi 0, %s23
      %s26 = sphi 0, %s24
      %s27 = sphi 0, %s25
      %s37 = sphi 0, %s39
      %s40 = sphi 0, %s37
      %s41 = sphi 0, %s40
      %s57 = sphi 0, %s41
      %s65 = sphi 0, %s67
      %s68 = sphi 0, %s65
      %s69 = sphi 0, %s68
      %s85 = sphi 0, %s69
      %s91 = sphi 0, %s93
      %s94 = sphi 0, %s91
      %s95 = sphi 0, %s94
      %s111 = sphi 0, %s95
    $region4: #{tpu_custom_call.1} parent=1 // loop_header_branch
      %18 = sbr.rel (%p16) target = $region8
    $region5: #{tpu_custom_call.1} parent=1 // loop_body
      %s20 = ssub.s32 %s15, 1
      %s21 = ssub.s32 %s15, 2
      %s28 = sadd.s32 1, %s23
      %p29 = scmp.ge.s32.totalorder %s28, 1
      %s30 = scalar_select %p29, 0, %s28
      %s31 = sadd.s32 1, %s22
      %s32 = scalar_select %p29, %s31, %s22
      %p33 = scmp.ge.s32.totalorder %s32, 8
      %s34 = scalar_select %p33, 0, %s32
      %s35 = ssub.s32 %s23, %s30
      %p36 = scmp.eq.s32.totalorder %s35, 0
      %s38 = sadd.s32 %s37, 1
      %s39 = scalar_select %p36, %s37, %s38
      %p42 = pneg %p36
      %p43 = scmp.eq.s32.totalorder %s15, 7
      %p44 = por %p42, %p43
      %p45 = scmp.ne.s32.totalorder %s37, %s40
      %p46 = scmp.eq.s32.totalorder %s15, 0
      %p47 = por %p45, %p46
      %p48 = scmp.ne.s32.totalorder %s37, %s40
      %p49 = scmp.eq.s32.totalorder %s20, 7
      %p50 = por %p48, %p49
      %p51 = scmp.ne.s32.totalorder %s40, %s41
      %p52 = scmp.eq.s32.totalorder %s20, 0
      %p53 = por %p51, %p52
      %p54 = scmp.ne.s32.totalorder %s40, %s41
      %p55 = scmp.eq.s32.totalorder %s21, 7
      %p56 = por %p54, %p55
      %p58 = scmp.ne.s32.totalorder %s41, %s57
      %p59 = scmp.eq.s32.totalorder %s21, 0
      %p60 = por %p58, %p59
      %s61 = ssub.s32 %s22, %s34
      %s62 = ssub.s32 %s23, %s30
      %s63 = sor.u32 %s61, %s62
      %p64 = scmp.eq.s32.totalorder %s63, 0
      %s66 = sadd.s32 %s65, 1
      %s67 = scalar_select %p64, %s65, %s66
      %p70 = pneg %p64
      %p71 = scmp.eq.s32.totalorder %s15, 7
      %p72 = por %p70, %p71
      %p73 = scmp.ne.s32.totalorder %s65, %s68
      %p74 = scmp.eq.s32.totalorder %s15, 0
      %p75 = por %p73, %p74
      %p76 = scmp.ne.s32.totalorder %s65, %s68
      %p77 = scmp.eq.s32.totalorder %s20, 7
      %p78 = por %p76, %p77
      %p79 = scmp.ne.s32.totalorder %s68, %s69
      %p80 = scmp.eq.s32.totalorder %s20, 0
      %p81 = por %p79, %p80
      %p82 = scmp.ne.s32.totalorder %s68, %s69
      %p83 = scmp.eq.s32.totalorder %s21, 7
      %p84 = por %p82, %p83
      %p86 = scmp.ne.s32.totalorder %s69, %s85
      %p87 = scmp.eq.s32.totalorder %s21, 0
      %p88 = por %p86, %p87
      %s89 = ssub.s32 %s22, %s34
      %p90 = scmp.eq.s32.totalorder %s89, 0
      %s92 = sadd.s32 %s91, 1
      %s93 = scalar_select %p90, %s91, %s92
      %p96 = pneg %p90
      %p97 = scmp.eq.s32.totalorder %s15, 7
      %p98 = por %p96, %p97
      %p99 = scmp.ne.s32.totalorder %s91, %s94
      %p100 = scmp.eq.s32.totalorder %s15, 0
      %p101 = por %p99, %p100
      %p102 = scmp.ne.s32.totalorder %s91, %s94
      %p103 = scmp.eq.s32.totalorder %s20, 7
      %p104 = por %p102, %p103
      %p105 = scmp.ne.s32.totalorder %s94, %s95
      %p106 = scmp.eq.s32.totalorder %s20, 0
      %p107 = por %p105, %p106
      %p108 = scmp.ne.s32.totalorder %s94, %s95
      %p109 = scmp.eq.s32.totalorder %s21, 7
      %p110 = por %p108, %p109
      %p112 = scmp.ne.s32.totalorder %s95, %s111
      %p113 = scmp.eq.s32.totalorder %s21, 0
      %p114 = por %p112, %p113
      %p115 = scmp.le.s32.totalorder 1, %s15
      %p116 = scmp.lt.s32.totalorder %s15, 9
      %p117 = pnand %p115, %p116
      %p118 = pneg %p117
      // Predicated region
      $region9: #{tpu_custom_call.1} parent=5 // pred_check
        _
      $region10: #{tpu_custom_call.1} parent=5 // pred_check_branch
        %120 = sbr.rel (%p117) target = $region12
      $region11: #{tpu_custom_call.1} parent=5 // pred_region
        %s121 = ssub.s32 %s15, 1
        // Predicated region
        $region13: #{tpu_custom_call.1} parent=11 // pred_check
          %p122 = pneg %p53
        $region14: #{tpu_custom_call.1} parent=11 // pred_check_branch
          %124 = sbr.rel (%p122) target = $region16
        $region15: #{tpu_custom_call.1} parent=11 // pred_region
          %s126 = ssub.s32 128, 128
          %127 = vsyncadd [#allocation3], %s126
          %s128 = smul.addr %s25, 128
          %s129 = scalar_lea.hbm %s0, %s128
          %s131 = sshll.u32 [#allocation2], 4
          %s132 = int_to_ptr.vmem [resolvable:$true] %s131
          %134 = dma.hbm_to_vmem [thread:$0]  %s129, 128, %s132, [#allocation3]
        $region16: #{tpu_custom_call.1} parent=11 // pred_fallthru
          _
      $region12: #{tpu_custom_call.1} parent=5 // pred_fallthru
        _
      %p135 = scmp.lt.s32.totalorder %s15, 8
      // Predicated region
      $region17: #{tpu_custom_call.1} parent=5 // pred_check
        %p136 = pneg %p135
      $region18: #{tpu_custom_call.1} parent=5 // pred_check_branch
        %138 = sbr.rel (%p136) target = $region20
      $region19: #{tpu_custom_call.1} parent=5 // pred_region
        // Predicated region
        $region21: #{tpu_custom_call.1} parent=19 // pred_check
          %p139 = pneg %p75
        $region22: #{tpu_custom_call.1} parent=19 // pred_check_branch
          %141 = sbr.rel (%p139) target = $region24
        $region23: #{tpu_custom_call.1} parent=19 // pred_region
          %s142 = sand.u32 %s65, 1
          %s143 = scalar_lea.sflag [#allocation6], %s142
          %s144 = sand.u32 %s65, 1
          %s145 = smul.addr %s144, 8
          %s146 = scalar_lea.vmem [#allocation5], %s145
          %s148 = ssub.s32 128, 128
          %149 = vsyncadd %s143, %s148
          %s150 = sadd.s32 %s23, %s22
          %s151 = smul.addr %s150, 128
          %s152 = scalar_lea.hbm %s1, %s151
          %s154 = sshll.u32 %s146, 4
          %s155 = int_to_ptr.vmem [resolvable:$true] %s154
          %157 = dma.hbm_to_vmem [thread:$0]  %s152, 128, %s155, %s143
        $region24: #{tpu_custom_call.1} parent=19 // pred_fallthru
          _
      $region20: #{tpu_custom_call.1} parent=5 // pred_fallthru
        _
      %p158 = scmp.le.s32.totalorder 1, %s15
      %p159 = scmp.lt.s32.totalorder %s15, 9
      %p160 = pnand %p158, %p159
      %p161 = pneg %p160
      // Predicated region
      $region25: #{tpu_custom_call.1} parent=5 // pred_check
        _
      $region26: #{tpu_custom_call.1} parent=5 // pred_check_branch
        %163 = sbr.rel (%p160) target = $region28
      $region27: #{tpu_custom_call.1} parent=5 // pred_region
        %s164 = ssub.s32 %s15, 1
        // Predicated region
        $region29: #{tpu_custom_call.1} parent=27 // pred_check
          %p165 = pneg %p53
        $region30: #{tpu_custom_call.1} parent=27 // pred_check_branch
          %167 = sbr.rel (%p165) target = $region32
        $region31: #{tpu_custom_call.1} parent=27 // pred_region
          %168 = dma.done [#allocation3], 128
        $region32: #{tpu_custom_call.1} parent=27 // pred_fallthru
          _
        %s169 = sand.u32 %s68, 1
        %s170 = scalar_lea.sflag [#allocation6], %s169
        %s171 = sand.u32 %s68, 1
        %s172 = smul.addr %s171, 8
        %s173 = scalar_lea.vmem [#allocation5], %s172
        // Predicated region
        $region33: #{tpu_custom_call.1} parent=27 // pred_check
          %p174 = pneg %p81
        $region34: #{tpu_custom_call.1} parent=27 // pred_check_branch
          %176 = sbr.rel (%p174) target = $region36
        $region35: #{tpu_custom_call.1} parent=27 // pred_region
          %177 = dma.done %s170, 128
        $region36: #{tpu_custom_call.1} parent=27 // pred_fallthru
          _
        %p178 = pneg %p53
        %p179 = pneg %p50
        %s180 = sand.u32 %s68, 1
        %s181 = scalar_lea.sflag [#allocation6], %s180
        %s182 = sand.u32 %s68, 1
        %s183 = smul.addr %s182, 8
        %s184 = scalar_lea.vmem [#allocation5], %s183
        %p185 = pneg %p81
        %p186 = pneg %p78
        %p187 = pneg %p107
        %p188 = pneg %p104
        %s189 = sand.u32 %s94, 1
        %s190 = scalar_lea.sflag [#allocation4], %s189
        %s191 = sand.u32 %s94, 1
        %s192 = smul.addr %s191, 8
        %s193 = scalar_lea.vmem [#allocation7], %s192
        %p194 = scmp.eq.s32.totalorder %s25, 0
        // Predicated region
        $region37: #{tpu_custom_call.1} parent=27 // pred_check
          %p195 = pneg %p194
        $region38: #{tpu_custom_call.1} parent=27 // pred_check_branch
          %197 = sbr.rel (%p195) target = $region40
        $region39: #{tpu_custom_call.1} parent=27 // pred_region
          %vm198 = vcmask 64512
          %199 = vst.msk [vmem:[%s193] sm:$0xff] %vm198, 0.0
        $region40: #{tpu_custom_call.1} parent=27 // pred_fallthru
          _
        %v200 = vld [vmem:[#allocation2] sm:$0xff]
        %v201 = vld [vmem:[%s173] sm:$0xff]
        %v202 = vand.u32 2147483647, %v201
        %v203 = vmul.f32 %v200, %v202
        %v204 = vld [vmem:[%s193] sm:$0xff]
        %v205 = vadd.f32 %v203, 0.0
        %v206 = vadd.f32 %v204, %v205
        %vm207 = vcmask 64512
        %208 = vst.msk [vmem:[%s193] sm:$0xff] %vm207, %v206
        %s209 = sand.u32 %s94, 1
        %s210 = scalar_lea.sflag [#allocation4], %s209
        %s211 = sand.u32 %s94, 1
        %s212 = smul.addr %s211, 8
        %s213 = scalar_lea.vmem [#allocation7], %s212
        // Predicated region
        $region41: #{tpu_custom_call.1} parent=27 // pred_check
          %p214 = pneg %p104
        $region42: #{tpu_custom_call.1} parent=27 // pred_check_branch
          %216 = sbr.rel (%p214) target = $region44
        $region43: #{tpu_custom_call.1} parent=27 // pred_region
          %s218 = ssub.s32 128, 128
          %219 = vsyncadd %s210, %s218
          %s220 = smul.addr %s24, 128
          %s221 = scalar_lea.hbm %s2, %s220
          %s223 = sshll.u32 %s213, 4
          %s224 = int_to_ptr.vmem [resolvable:$true] %s223
          %226 = dma.vmem_to_hbm [thread:$0]  %s224, 128, %s221, %s210
        $region44: #{tpu_custom_call.1} parent=27 // pred_fallthru
          _
      $region28: #{tpu_custom_call.1} parent=5 // pred_fallthru
        _
      %p227 = scmp.le.s32.totalorder 2, %s15
      // Predicated region
      $region45: #{tpu_custom_call.1} parent=5 // pred_check
        %p228 = pneg %p227
      $region46: #{tpu_custom_call.1} parent=5 // pred_check_branch
        %230 = sbr.rel (%p228) target = $region48
      $region47: #{tpu_custom_call.1} parent=5 // pred_region
        %s231 = ssub.s32 %s15, 2
        // Predicated region
        $region49: #{tpu_custom_call.1} parent=47 // pred_check
          %p232 = pneg %p110
        $region50: #{tpu_custom_call.1} parent=47 // pred_check_branch
          %234 = sbr.rel (%p232) target = $region52
        $region51: #{tpu_custom_call.1} parent=47 // pred_region
          %s235 = sand.u32 %s95, 1
          %s236 = scalar_lea.sflag [#allocation4], %s235
          %s237 = sand.u32 %s95, 1
          %s238 = smul.addr %s237, 8
          %s239 = scalar_lea.vmem [#allocation7], %s238
          %240 = dma.done %s236, 128
        $region52: #{tpu_custom_call.1} parent=47 // pred_fallthru
          _
      $region48: #{tpu_custom_call.1} parent=5 // pred_fallthru
        _
    $region6: #{tpu_custom_call.1} parent=1 // loop_footer
      %s19 = sadd.s32 1, %s15
    $region7: #{tpu_custom_call.1} parent=1 // loop_footer_branch
      %14 = sbr.rel target = $region3
    $region8: #{tpu_custom_call.1} parent=1 // loop_exit
      _
    %241 = vsyncpa [#allocation3], 1
    %s242 = scalar_lea.sflag [#allocation3], 1
    %243 = vsyncpa %s242, 1
    %244 = vsyncpa [#allocation6], 1
    %s245 = scalar_lea.sflag [#allocation6], 1
    %246 = vsyncpa %s245, 1
    %247 = vsyncpa [#allocation4], 1
    %s248 = scalar_lea.sflag [#allocation4], 1
    %249 = vsyncpa %s248, 1

</llo_original>
